<compile_context>
chip_gen: v5e
topology: v5e:2x2
jax: 0.10.0
libtpu: 0.0.40
codegen_flags: <defaults>
</compile_context>

<pallas_src>
import jax
import jax.numpy as jnp
from jax.experimental import pallas as pl
from jax.experimental.pallas import tpu as pltpu

BN_EPS = 1e-5
LEAKY_SLOPE = 0.2
LANE = 128      # lane padding for the tiny (., 2) output / 64-wide layer 3
OUT_DIM = 2
D_IN = 768


def _round_up(n, m):
    return ((n + m - 1) // m) * m


def _leaky_relu(v):
    return jnp.where(v >= 0, v, LEAKY_SLOPE * v)


def classifier_kernel(x_ref,
                      w1_ref, c1_ref,
                      w2_ref, c2_ref,
                      w3_ref, c3_ref,
                      w4_ref, c4_ref,
                      o_ref):
    # f32 rows from HBM, cast bf16 in-register (VPU, hidden under the DMA):
    # avoids a separate wrapper-side convert/pad pass over HBM.
    x = x_ref[...].astype(jnp.bfloat16)

    # Layer 1: Linear(768->256) with bias+BN folded into (W1', c1), LeakyReLU(0.2)
    h = jnp.dot(x, w1_ref[...], preferred_element_type=jnp.float32)
    h = _leaky_relu(h + c1_ref[...])

    # Layer 2: Linear(256->128) + folded BN + LeakyReLU
    h = jnp.dot(h.astype(jnp.bfloat16), w2_ref[...], preferred_element_type=jnp.float32)
    h = _leaky_relu(h + c2_ref[...])

    # Layer 3: Linear(128->64) + folded BN + LeakyReLU, lane-padded to 128 cols
    # (padded cols are exactly 0) so layer 4 runs with K=128 on the MXU.
    h = jnp.dot(h.astype(jnp.bfloat16), w3_ref[...], preferred_element_type=jnp.float32)
    h = _leaky_relu(h + c3_ref[...])

    # Layer 4: Linear(64->2), lane-padded to 128 output columns (zeros beyond col 1).
    h = jnp.dot(h.astype(jnp.bfloat16), w4_ref[...], preferred_element_type=jnp.float32)
    # bf16 store: lane-dense (tb, 128) unmasked vst, half the writeback bytes of f32.
    o_ref[...] = (h + c4_ref[...]).astype(o_ref.dtype)
    # TODO(synk): pack 64 rows' 2 logits into one 128-lane row (idle XLU shuffle)
    # to shrink the writeback to ~2/128 of this padded layout.


def fold_params(raw_params):
    """One-time constant fold of bias + inference BatchNorm into bf16 weights.

    Layer 3 (128->64) is lane-padded to 128 output columns (zero weight cols,
    zero bias entries -> padded activations are exactly 0), and layer 4's
    weight is padded to (128, 128) accordingly.
    """
    folded = []
    for li, layer in enumerate(raw_params):
        if li < 3:
            w, b, gamma, beta, mean, var = layer          # w: (dout, din) torch layout
            scale = gamma / jnp.sqrt(var + BN_EPS)        # (dout,)
            w_f = (w.T * scale[None, :]).astype(jnp.float32)              # (din, dout)
            c_f = ((b - mean) * scale + beta).astype(jnp.float32)
            if li == 2:                                   # pad 64 -> 128 cols (v5e K=128)
                din, dout = w_f.shape
                w_f = jnp.zeros((din, LANE), jnp.float32).at[:, :dout].set(w_f)
                c_f = jnp.zeros((LANE,), jnp.float32).at[:dout].set(c_f)
        else:
            w, b = layer                                   # (2, 64), (2,)
            dout, din = w.shape
            w_f = jnp.zeros((LANE, LANE), jnp.float32).at[:din, :dout].set(w.T)
            c_f = jnp.zeros((LANE,), jnp.float32).at[:dout].set(b)
        folded.append(w_f.astype(jnp.bfloat16))
        folded.append(c_f.reshape(1, -1).astype(jnp.float32))
    return folded


def _choose_tile(B):
    if B <= 128:
        # Tiny batch: a single block equal to the full array -> no padding, no
        # divisibility constraints, latency-bound single step.
        return B
    # >= 2 grid steps so the batch axis can shard across v7x's 2 TensorCores;
    # 16-row alignment (bf16 output sublane pack); cap at 1024 rows
    # (~8 MiB VMEM incl. double buffers, fits v5e's 16 MiB scoped default).
    return min(1024, _round_up(pl.cdiv(B, 2), 16))


def classifier_forward(x, folded_params, *, tb=None):
    B, d_in = x.shape
    assert d_in == D_IN
    if tb is None:
        tb = _choose_tile(B)
    grid = (pl.cdiv(B, tb),)

    # x streamed as-is (f32 or bf16) — no wrapper-side cast/pad HBM pass.
    in_specs = [pl.BlockSpec((tb, D_IN), lambda i: (i, 0))]
    for p in folded_params:
        # Constant index_map -> weight/bias blocks stay resident in VMEM across
        # grid steps.  (Single-buffering them via pipeline_mode would only buy
        # ~0.5 MiB of headroom; skipped.)
        in_specs.append(pl.BlockSpec(p.shape, lambda i: (0, 0)))

    out = pl.pallas_call(
        classifier_kernel,
        out_shape=jax.ShapeDtypeStruct((B, LANE), jnp.bfloat16),
        grid=grid,
        in_specs=in_specs,
        out_specs=pl.BlockSpec((tb, LANE), lambda i: (i, 0)),
        compiler_params=pltpu.CompilerParams(
            # Batch axis is embarrassingly parallel -> megacore sharding on v7x.
            dimension_semantics=("parallel",),
        ),
    )(x, *folded_params)

    # Note: logits are bf16 (fine for classification/argmax); cast downstream
    # if full precision is required.
    return out[:, :OUT_DIM]


def make_raw_params(key):
    """Deterministic params mirroring Classifier.__init__ (torch layouts + BN stats)."""
    dims = [(768, 256), (256, 128), (128, 64), (64, 2)]
    keys = jax.random.split(key, 8)
    raw = []
    ki = 0
    for li, (din, dout) in enumerate(dims):
        bound = 1.0 / jnp.sqrt(jnp.float32(din))
        w = jax.random.uniform(keys[ki], (dout, din), jnp.float32, -bound, bound); ki += 1
        b = jax.random.uniform(keys[ki], (dout,), jnp.float32, -bound, bound); ki += 1
        if li < 3:
            gamma = 1.0 + 0.01 * jnp.arange(dout, dtype=jnp.float32)
            beta = 0.02 * jnp.arange(dout, dtype=jnp.float32)
            mean = 0.005 * jnp.arange(dout, dtype=jnp.float32)
            var = 1.0 + 0.003 * jnp.arange(dout, dtype=jnp.float32)
            raw.append((w, b, gamma, beta, mean, var))
        else:
            raw.append((w, b))
    return raw


def reference_forward(x, raw_params, *, matmul_dtype=jnp.float32):
    """Module-order reference (Linear -> BN(inference) -> LeakyReLU), unfolded params."""
    h = x
    for li, layer in enumerate(raw_params):
        if li < 3:
            w, b, gamma, beta, mean, var = layer
        else:
            w, b = layer
        h = jnp.dot(h.astype(matmul_dtype), w.T.astype(matmul_dtype),
                    preferred_element_type=jnp.float32) + b
        if li < 3:
            h = (h - mean) / jnp.sqrt(var + BN_EPS) * gamma + beta
            h = jnp.where(h >= 0, h, LEAKY_SLOPE * h)
    return h


if __name__ == "__main__":
    key = jax.random.PRNGKey(0)
    kx, kp = jax.random.split(key)
    B = 8
    x = jax.random.normal(kx, (B, D_IN), jnp.float32)

    raw_params = make_raw_params(kp)
    folded_params = fold_params(raw_params)

    out = classifier_forward(x, folded_params)
    out = jax.block_until_ready(out)
    assert out.shape == (B, OUT_DIM)

    # Compare against unfolded, module-order math (bf16 matmul inputs to match
    # kernel dtype).  Tolerance covers bf16 matmuls + bf16 logit store.
    ref = reference_forward(x, raw_params, matmul_dtype=jnp.bfloat16)
    out_f32 = out.astype(jnp.float32)
    max_err = jnp.max(jnp.abs(out_f32 - ref))
    assert jnp.allclose(out_f32, ref, atol=3e-2, rtol=3e-2), f"max_err={max_err}"
    print("KERNEL_OK")
</pallas_src>

<mosaic_0001>
module attributes {stable_mosaic.version = 11 : i64} {
  func.func @classifier_kernel(%arg0: i32, %arg1: memref<8x768xf32, #tpu.memory_space<vmem>>, %arg2: memref<768x256xbf16, #tpu.memory_space<vmem>>, %arg3: memref<1x256xf32, #tpu.memory_space<vmem>>, %arg4: memref<256x128xbf16, #tpu.memory_space<vmem>>, %arg5: memref<1x128xf32, #tpu.memory_space<vmem>>, %arg6: memref<128x128xbf16, #tpu.memory_space<vmem>>, %arg7: memref<1x128xf32, #tpu.memory_space<vmem>>, %arg8: memref<128x128xbf16, #tpu.memory_space<vmem>>, %arg9: memref<1x128xf32, #tpu.memory_space<vmem>>, %arg10: memref<8x128xbf16, #tpu.memory_space<vmem>>) attributes {dimension_semantics = [#tpu.dimension_semantics<parallel>], iteration_bounds = array<i64: 1>, scalar_prefetch = 0 : i64, scratch_operands = 0 : i64, tpu.core_type = #tpu.core_type<tc>, window_params = [{transform_indices = @transform_0, window_bounds = array<i64: 8, 768>}, {pipeline_mode = #tpu.pipeline_mode<synchronous>, transform_indices = @transform_1, window_bounds = array<i64: 768, 256>}, {pipeline_mode = #tpu.pipeline_mode<synchronous>, transform_indices = @transform_2, window_bounds = array<i64: 1, 256>}, {pipeline_mode = #tpu.pipeline_mode<synchronous>, transform_indices = @transform_3, window_bounds = array<i64: 256, 128>}, {pipeline_mode = #tpu.pipeline_mode<synchronous>, transform_indices = @transform_4, window_bounds = array<i64: 1, 128>}, {pipeline_mode = #tpu.pipeline_mode<synchronous>, transform_indices = @transform_5, window_bounds = array<i64: 128, 128>}, {pipeline_mode = #tpu.pipeline_mode<synchronous>, transform_indices = @transform_6, window_bounds = array<i64: 1, 128>}, {pipeline_mode = #tpu.pipeline_mode<synchronous>, transform_indices = @transform_7, window_bounds = array<i64: 128, 128>}, {pipeline_mode = #tpu.pipeline_mode<synchronous>, transform_indices = @transform_8, window_bounds = array<i64: 1, 128>}, {transform_indices = @transform_9, window_bounds = array<i64: 8, 128>}]} {
    %c0 = arith.constant 0 : index
    %c0_0 = arith.constant 0 : index
    %0 = vector.load %arg1[%c0, %c0_0] : memref<8x768xf32, #tpu.memory_space<vmem>>, vector<8x768xf32>
    %1 = arith.truncf %0 : vector<8x768xf32> to vector<8x768xbf16>
    %c0_1 = arith.constant 0 : index
    %c0_2 = arith.constant 0 : index
    %2 = vector.load %arg2[%c0_1, %c0_2] : memref<768x256xbf16, #tpu.memory_space<vmem>>, vector<768x256xbf16>
    %cst = arith.constant dense<0.000000e+00> : vector<8x256xf32>
    %3 = tpu.matmul %1, %2, %cst {dimension_numbers = #tpu.dot_dimension_numbers<[1], [0], [0], [1], [0, 0, 1, 1], [], []>} : vector<8x768xbf16>, vector<768x256xbf16>, vector<8x256xf32> -> vector<8x256xf32>
    %c0_3 = arith.constant 0 : index
    %c0_4 = arith.constant 0 : index
    %4 = vector.load %arg3[%c0_3, %c0_4] : memref<1x256xf32, #tpu.memory_space<vmem>>, vector<1x256xf32>
    %5 = vector.broadcast %4 : vector<1x256xf32> to vector<8x256xf32>
    %6 = arith.addf %3, %5 : vector<8x256xf32>
    %cst_5 = arith.constant 0.000000e+00 : f32
    %7 = vector.broadcast %cst_5 : f32 to vector<8x256xf32>
    %8 = arith.cmpf oge, %6, %7 : vector<8x256xf32>
    %cst_6 = arith.constant 2.000000e-01 : f32
    %9 = vector.broadcast %cst_6 : f32 to vector<8x256xf32>
    %10 = arith.mulf %9, %6 : vector<8x256xf32>
    %11 = arith.select %8, %6, %10 : vector<8x256xi1>, vector<8x256xf32>
    %12 = arith.truncf %11 : vector<8x256xf32> to vector<8x256xbf16>
    %c0_7 = arith.constant 0 : index
    %c0_8 = arith.constant 0 : index
    %13 = vector.load %arg4[%c0_7, %c0_8] : memref<256x128xbf16, #tpu.memory_space<vmem>>, vector<256x128xbf16>
    %cst_9 = arith.constant dense<0.000000e+00> : vector<8x128xf32>
    %14 = tpu.matmul %12, %13, %cst_9 {dimension_numbers = #tpu.dot_dimension_numbers<[1], [0], [0], [1], [0, 0, 1, 1], [], []>} : vector<8x256xbf16>, vector<256x128xbf16>, vector<8x128xf32> -> vector<8x128xf32>
    %c0_10 = arith.constant 0 : index
    %c0_11 = arith.constant 0 : index
    %15 = vector.load %arg5[%c0_10, %c0_11] : memref<1x128xf32, #tpu.memory_space<vmem>>, vector<1x128xf32>
    %16 = vector.broadcast %15 : vector<1x128xf32> to vector<8x128xf32>
    %17 = arith.addf %14, %16 : vector<8x128xf32>
    %cst_12 = arith.constant 0.000000e+00 : f32
    %18 = vector.broadcast %cst_12 : f32 to vector<8x128xf32>
    %19 = arith.cmpf oge, %17, %18 : vector<8x128xf32>
    %cst_13 = arith.constant 2.000000e-01 : f32
    %20 = vector.broadcast %cst_13 : f32 to vector<8x128xf32>
    %21 = arith.mulf %20, %17 : vector<8x128xf32>
    %22 = arith.select %19, %17, %21 : vector<8x128xi1>, vector<8x128xf32>
    %23 = arith.truncf %22 : vector<8x128xf32> to vector<8x128xbf16>
    %c0_14 = arith.constant 0 : index
    %c0_15 = arith.constant 0 : index
    %24 = vector.load %arg6[%c0_14, %c0_15] : memref<128x128xbf16, #tpu.memory_space<vmem>>, vector<128x128xbf16>
    %cst_16 = arith.constant dense<0.000000e+00> : vector<8x128xf32>
    %25 = tpu.matmul %23, %24, %cst_16 {dimension_numbers = #tpu.dot_dimension_numbers<[1], [0], [0], [1], [0, 0, 1, 1], [], []>} : vector<8x128xbf16>, vector<128x128xbf16>, vector<8x128xf32> -> vector<8x128xf32>
    %c0_17 = arith.constant 0 : index
    %c0_18 = arith.constant 0 : index
    %26 = vector.load %arg7[%c0_17, %c0_18] : memref<1x128xf32, #tpu.memory_space<vmem>>, vector<1x128xf32>
    %27 = vector.broadcast %26 : vector<1x128xf32> to vector<8x128xf32>
    %28 = arith.addf %25, %27 : vector<8x128xf32>
    %cst_19 = arith.constant 0.000000e+00 : f32
    %29 = vector.broadcast %cst_19 : f32 to vector<8x128xf32>
    %30 = arith.cmpf oge, %28, %29 : vector<8x128xf32>
    %cst_20 = arith.constant 2.000000e-01 : f32
    %31 = vector.broadcast %cst_20 : f32 to vector<8x128xf32>
    %32 = arith.mulf %31, %28 : vector<8x128xf32>
    %33 = arith.select %30, %28, %32 : vector<8x128xi1>, vector<8x128xf32>
    %34 = arith.truncf %33 : vector<8x128xf32> to vector<8x128xbf16>
    %c0_21 = arith.constant 0 : index
    %c0_22 = arith.constant 0 : index
    %35 = vector.load %arg8[%c0_21, %c0_22] : memref<128x128xbf16, #tpu.memory_space<vmem>>, vector<128x128xbf16>
    %cst_23 = arith.constant dense<0.000000e+00> : vector<8x128xf32>
    %36 = tpu.matmul %34, %35, %cst_23 {dimension_numbers = #tpu.dot_dimension_numbers<[1], [0], [0], [1], [0, 0, 1, 1], [], []>} : vector<8x128xbf16>, vector<128x128xbf16>, vector<8x128xf32> -> vector<8x128xf32>
    %c0_24 = arith.constant 0 : index
    %c0_25 = arith.constant 0 : index
    %37 = vector.load %arg9[%c0_24, %c0_25] : memref<1x128xf32, #tpu.memory_space<vmem>>, vector<1x128xf32>
    %38 = vector.broadcast %37 : vector<1x128xf32> to vector<8x128xf32>
    %39 = arith.addf %36, %38 : vector<8x128xf32>
    %40 = arith.truncf %39 : vector<8x128xf32> to vector<8x128xbf16>
    %c0_26 = arith.constant 0 : index
    %c0_27 = arith.constant 0 : index
    %41 = vector.load %arg10[%c0_26, %c0_27] : memref<8x128xbf16, #tpu.memory_space<vmem>>, vector<8x128xbf16>
    tpu.vector_store %arg10[%c0_26, %c0_27], %40 {strides = array<i32>} : memref<8x128xbf16, #tpu.memory_space<vmem>>, vector<8x128xbf16>,
    return
  }
  func.func @transform_0(%arg0: i32) -> (i32, i32) {
    %c0_i32 = arith.constant 0 : i32
    %c0_i32_0 = arith.constant 0 : i32
    return %arg0, %c0_i32 : i32, i32
  }
  func.func @transform_1(%arg0: i32) -> (i32, i32) {
    %c0_i32 = arith.constant 0 : i32
    %c0_i32_0 = arith.constant 0 : i32
    %c0_i32_1 = arith.constant 0 : i32
    return %c0_i32, %c0_i32_0 : i32, i32
  }
  func.func @transform_2(%arg0: i32) -> (i32, i32) {
    %c0_i32 = arith.constant 0 : i32
    %c0_i32_0 = arith.constant 0 : i32
    %c0_i32_1 = arith.constant 0 : i32
    return %c0_i32, %c0_i32_0 : i32, i32
  }
  func.func @transform_3(%arg0: i32) -> (i32, i32) {
    %c0_i32 = arith.constant 0 : i32
    %c0_i32_0 = arith.constant 0 : i32
    %c0_i32_1 = arith.constant 0 : i32
    return %c0_i32, %c0_i32_0 : i32, i32
  }
  func.func @transform_4(%arg0: i32) -> (i32, i32) {
    %c0_i32 = arith.constant 0 : i32
    %c0_i32_0 = arith.constant 0 : i32
    %c0_i32_1 = arith.constant 0 : i32
    return %c0_i32, %c0_i32_0 : i32, i32
  }
  func.func @transform_5(%arg0: i32) -> (i32, i32) {
    %c0_i32 = arith.constant 0 : i32
    %c0_i32_0 = arith.constant 0 : i32
    %c0_i32_1 = arith.constant 0 : i32
    return %c0_i32, %c0_i32_0 : i32, i32
  }
  func.func @transform_6(%arg0: i32) -> (i32, i32) {
    %c0_i32 = arith.constant 0 : i32
    %c0_i32_0 = arith.constant 0 : i32
    %c0_i32_1 = arith.constant 0 : i32
    return %c0_i32, %c0_i32_0 : i32, i32
  }
  func.func @transform_7(%arg0: i32) -> (i32, i32) {
    %c0_i32 = arith.constant 0 : i32
    %c0_i32_0 = arith.constant 0 : i32
    %c0_i32_1 = arith.constant 0 : i32
    return %c0_i32, %c0_i32_0 : i32, i32
  }
  func.func @transform_8(%arg0: i32) -> (i32, i32) {
    %c0_i32 = arith.constant 0 : i32
    %c0_i32_0 = arith.constant 0 : i32
    %c0_i32_1 = arith.constant 0 : i32
    return %c0_i32, %c0_i32_0 : i32, i32
  }
  func.func @transform_9(%arg0: i32) -> (i32, i32) {
    %c0_i32 = arith.constant 0 : i32
    %c0_i32_0 = arith.constant 0 : i32
    return %arg0, %c0_i32 : i32, i32
  }
}

</mosaic_0001>

<llo_original>
// kernel: tpu_custom_call.1
$region0: #{tpu_custom_call.1}
  #allocation0 [shape = 'u32[]', space=smem, size = 0x4, offset = 0x4, fixed_abs, tag = 'smem constant byte address 0x4 - core index']
  #allocation1 [shape = 'u32[72,128]{1,0:T(1,128)}', space=vmem, size = 0x9000, scoped, tag = 'internal scratch']
  %s0 = inlined_call_operand.hbm [shape: f32[8,768], index: 0, kind: input, shape index: {}]
  %s1 = inlined_call_operand.hbm [shape: bf16[768,256], index: 1, kind: input, shape index: {}]
  %s2 = inlined_call_operand.hbm [shape: f32[1,256], index: 2, kind: input, shape index: {}]
  %s3 = inlined_call_operand.hbm [shape: bf16[256,128], index: 3, kind: input, shape index: {}]
  %s4 = inlined_call_operand.vmem [shape: f32[1,128], index: 4, kind: input, shape index: {}]
  %s5 = inlined_call_operand.hbm [shape: bf16[128,128], index: 5, kind: input, shape index: {}]
  %s6 = inlined_call_operand.vmem [shape: f32[1,128], index: 6, kind: input, shape index: {}]
  %s7 = inlined_call_operand.hbm [shape: bf16[128,128], index: 7, kind: input, shape index: {}]
  %s8 = inlined_call_operand.vmem [shape: f32[1,128], index: 8, kind: input, shape index: {}]
  %s9 = inlined_call_operand.hbm [shape: bf16[8,128], index: 9, kind: output, shape index: {}]
  %s10 = sld [smem:[#allocation0]]
  $region70: #{tpu_custom_call.1} parent=0
    _
  %s12 = ssub.s32 1, %s10
  %s13 = scalar_select 0, %s12, %s10
  $region1: #{tpu_custom_call.1} parent=0
    #allocation2 [shape = 'u8[24576]{0}', space=vmem, size = 0x6000, scoped, tag = 'input window, operand 0, single buffered']
    #allocation3 [shape = 's32[1]{0}', space=sflag, size = 0x4, scoped, tag = 'scoped memory for tpu_custom_call.1']
    #allocation4 [shape = 's32[1]{0}', space=sflag, size = 0x4, scoped, tag = 'scoped memory for tpu_custom_call.1']
    #allocation5 [shape = 'u8[393216]{0}', space=vmem, size = 0x60000, scoped, tag = 'input window, operand 1, single buffered']
    #allocation6 [shape = 's32[1]{0}', space=sflag, size = 0x4, scoped, tag = 'scoped memory for tpu_custom_call.1']
    #allocation7 [shape = 'u8[1024]{0}', space=vmem, size = 0x400, scoped, tag = 'input window, operand 2, single buffered']
    #allocation8 [shape = 'u8[65536]{0}', space=vmem, size = 0x10000, scoped, tag = 'input window, operand 3, single buffered']
    #allocation9 [shape = 's32[1]{0}', space=sflag, size = 0x4, scoped, tag = 'scoped memory for tpu_custom_call.1']
    #allocation10 [shape = 'u8[32768]{0}', space=vmem, size = 0x8000, scoped, tag = 'input window, operand 5, single buffered']
    #allocation11 [shape = 'u8[32768]{0}', space=vmem, size = 0x8000, scoped, tag = 'input window, operand 7, single buffered']
    #allocation12 [shape = 's32[1]{0}', space=sflag, size = 0x4, scoped, tag = 'scoped memory for tpu_custom_call.1']
    #allocation13 [shape = 'u8[2048]{0}', space=vmem, size = 0x800, scoped, tag = 'output window, operand 0, single buffered']
    %14 = vsyncpa [#allocation3], 0
    %15 = vsyncpa [#allocation6], 0
    %16 = vsyncpa [#allocation9], 0
    %17 = vsyncpa [#allocation12], 0
    %18 = vsyncpa [#allocation4], 0
    // Predicated region
    $region2: #{tpu_custom_call.1} parent=1 // pred_check
      _
    $region3: #{tpu_custom_call.1} parent=1 // pred_check_branch
      %20 = sbr.rel (0) target = $region5
    $region4: #{tpu_custom_call.1} parent=1 // pred_region
      %22 = vsyncadd [#allocation3], 0
      %s24 = sshll.u32 %s0, 4
      %s25 = int_to_ptr.hbm [resolvable:$true] %s24
      %s26 = sshll.u32 [#allocation2], 4
      %s27 = int_to_ptr.vmem [resolvable:$true] %s26
      %29 = dma.hbm_to_vmem [thread:$0]  %s25, 768, %s27, [#allocation3]
    $region5: #{tpu_custom_call.1} parent=1 // pred_fallthru
      _
    // Predicated region
    $region6: #{tpu_custom_call.1} parent=1 // pred_check
      _
    $region7: #{tpu_custom_call.1} parent=1 // pred_check_branch
      %31 = sbr.rel (0) target = $region9
    $region8: #{tpu_custom_call.1} parent=1 // pred_region
      %33 = vsyncadd [#allocation6], 0
      %s34 = sshll.u32 %s1, 4
      %s35 = int_to_ptr.hbm [resolvable:$true] %s34
      %s36 = sshll.u32 [#allocation5], 4
      %s37 = int_to_ptr.vmem [resolvable:$true] %s36
      %42 = dma.hbm_to_vmem [thread:$0]  %s35, 12288, %s37, [#allocation6], 128, 128, 8
    $region9: #{tpu_custom_call.1} parent=1 // pred_fallthru
      _
    // Predicated region
    $region10: #{tpu_custom_call.1} parent=1 // pred_check
      _
    $region11: #{tpu_custom_call.1} parent=1 // pred_check_branch
      %44 = sbr.rel (0) target = $region13
    $region12: #{tpu_custom_call.1} parent=1 // pred_region
      %46 = vsyncadd [#allocation6], 0
      %s48 = sshll.u32 %s2, 4
      %s49 = int_to_ptr.hbm [resolvable:$true] %s48
      %s50 = sshll.u32 [#allocation7], 4
      %s51 = int_to_ptr.vmem [resolvable:$true] %s50
      %53 = dma.hbm_to_vmem [thread:$0]  %s49, 32, %s51, [#allocation6]
    $region13: #{tpu_custom_call.1} parent=1 // pred_fallthru
      _
    // Predicated region
    $region14: #{tpu_custom_call.1} parent=1 // pred_check
      _
    $region15: #{tpu_custom_call.1} parent=1 // pred_check_branch
      %55 = sbr.rel (0) target = $region17
    $region16: #{tpu_custom_call.1} parent=1 // pred_region
      %57 = vsyncadd [#allocation9], 0
      %s58 = sshll.u32 %s3, 4
      %s59 = int_to_ptr.hbm [resolvable:$true] %s58
      %s60 = sshll.u32 [#allocation8], 4
      %s61 = int_to_ptr.vmem [resolvable:$true] %s60
      %66 = dma.hbm_to_vmem [thread:$0]  %s59, 2048, %s61, [#allocation9], 64, 64, 4
    $region17: #{tpu_custom_call.1} parent=1 // pred_fallthru
      _
    // Predicated region
    $region18: #{tpu_custom_call.1} parent=1 // pred_check
      _
    $region19: #{tpu_custom_call.1} parent=1 // pred_check_branch
      %68 = sbr.rel (0) target = $region21
    $region20: #{tpu_custom_call.1} parent=1 // pred_region
      _
    $region21: #{tpu_custom_call.1} parent=1 // pred_fallthru
      _
    // Predicated region
    $region22: #{tpu_custom_call.1} parent=1 // pred_check
      _
    $region23: #{tpu_custom_call.1} parent=1 // pred_check_branch
      %70 = sbr.rel (0) target = $region25
    $region24: #{tpu_custom_call.1} parent=1 // pred_region
      %72 = vsyncadd [#allocation9], 0
      %s73 = sshll.u32 %s5, 4
      %s74 = int_to_ptr.hbm [resolvable:$true] %s73
      %s75 = sshll.u32 [#allocation10], 4
      %s76 = int_to_ptr.vmem [resolvable:$true] %s75
      %81 = dma.hbm_to_vmem [thread:$0]  %s74, 1024, %s76, [#allocation9], 64, 64, 4
    $region25: #{tpu_custom_call.1} parent=1 // pred_fallthru
      _
    // Predicated region
    $region26: #{tpu_custom_call.1} parent=1 // pred_check
      _
    $region27: #{tpu_custom_call.1} parent=1 // pred_check_branch
      %83 = sbr.rel (0) target = $region29
    $region28: #{tpu_custom_call.1} parent=1 // pred_region
      _
    $region29: #{tpu_custom_call.1} parent=1 // pred_fallthru
      _
    // Predicated region
    $region30: #{tpu_custom_call.1} parent=1 // pred_check
      _
    $region31: #{tpu_custom_call.1} parent=1 // pred_check_branch
      %85 = sbr.rel (0) target = $region33
    $region32: #{tpu_custom_call.1} parent=1 // pred_region
      %87 = vsyncadd [#allocation12], 0
      %s88 = sshll.u32 %s7, 4
      %s89 = int_to_ptr.hbm [resolvable:$true] %s88
      %s90 = sshll.u32 [#allocation11], 4
      %s91 = int_to_ptr.vmem [resolvable:$true] %s90
      %96 = dma.hbm_to_vmem [thread:$0]  %s89, 1024, %s91, [#allocation12], 64, 64, 4
    $region33: #{tpu_custom_call.1} parent=1 // pred_fallthru
      _
    // Predicated region
    $region34: #{tpu_custom_call.1} parent=1 // pred_check
      _
    $region35: #{tpu_custom_call.1} parent=1 // pred_check_branch
      %98 = sbr.rel (0) target = $region37
    $region36: #{tpu_custom_call.1} parent=1 // pred_region
      _
    $region37: #{tpu_custom_call.1} parent=1 // pred_fallthru
      _
    // Predicated region
    $region38: #{tpu_custom_call.1} parent=1 // pred_check
      _
    $region39: #{tpu_custom_call.1} parent=1 // pred_check_branch
      %100 = sbr.rel (0) target = $region41
    $region40: #{tpu_custom_call.1} parent=1 // pred_region
      %102 = dma.done [#allocation3], 768
    $region41: #{tpu_custom_call.1} parent=1 // pred_fallthru
      _
    // Predicated region
    $region42: #{tpu_custom_call.1} parent=1 // pred_check
      _
    $region43: #{tpu_custom_call.1} parent=1 // pred_check_branch
      %104 = sbr.rel (0) target = $region45
    $region44: #{tpu_custom_call.1} parent=1 // pred_region
      %106 = dma.done [#allocation6], 12288
    $region45: #{tpu_custom_call.1} parent=1 // pred_fallthru
      _
    // Predicated region
    $region46: #{tpu_custom_call.1} parent=1 // pred_check
      _
    $region47: #{tpu_custom_call.1} parent=1 // pred_check_branch
      %108 = sbr.rel (0) target = $region49
    $region48: #{tpu_custom_call.1} parent=1 // pred_region
      %110 = dma.done [#allocation6], 32
    $region49: #{tpu_custom_call.1} parent=1 // pred_fallthru
      _
    // Predicated region
    $region50: #{tpu_custom_call.1} parent=1 // pred_check
      _
    $region51: #{tpu_custom_call.1} parent=1 // pred_check_branch
      %112 = sbr.rel (0) target = $region53
    $region52: #{tpu_custom_call.1} parent=1 // pred_region
      %114 = dma.done [#allocation9], 2048
    $region53: #{tpu_custom_call.1} parent=1 // pred_fallthru
      _
    // Predicated region
    $region54: #{tpu_custom_call.1} parent=1 // pred_check
      _
    $region55: #{tpu_custom_call.1} parent=1 // pred_check_branch
      %116 = sbr.rel (0) target = $region57
    $region56: #{tpu_custom_call.1} parent=1 // pred_region
      %118 = dma.done [#allocation9], 1024
    $region57: #{tpu_custom_call.1} parent=1 // pred_fallthru
      _
    // Predicated region
    $region58: #{tpu_custom_call.1} parent=1 // pred_check
      _
    $region59: #{tpu_custom_call.1} parent=1 // pred_check_branch
      %120 = sbr.rel (0) target = $region61
    $region60: #{tpu_custom_call.1} parent=1 // pred_region
      %122 = dma.done [#allocation12], 1024
    $region61: #{tpu_custom_call.1} parent=1 // pred_fallthru
      _
    %v123 = vld [vmem:[#allocation2] sm:$0xff]
    %v124 = vld [vmem:[#allocation2 + $0x8] sm:$0xff]
    %v125 = vld [vmem:[#allocation2 + $0x10] sm:$0xff]
    %v126 = vld [vmem:[#allocation2 + $0x18] sm:$0xff]
    %v127 = vld [vmem:[#allocation2 + $0x20] sm:$0xff]
    %v128 = vld [vmem:[#allocation2 + $0x28] sm:$0xff]
    %v129 = vpack.c.bf16 %v123, %v123
    %v130 = vpack.c.bf16 %v124, %v124
    %v131 = vpack.c.bf16 %v125, %v125
    %v132 = vpack.c.bf16 %v126, %v126
    %v133 = vpack.c.bf16 %v127, %v127
    %v134 = vpack.c.bf16 %v128, %v128
    %v135 = vld [vmem:[#allocation5] sm:$0xff]
    %v136 = vld [vmem:[#allocation5 + $0x8] sm:$0xff]
    %v137 = vld [vmem:[#allocation5 + $0x10] sm:$0xff]
    %v138 = vld [vmem:[#allocation5 + $0x18] sm:$0xff]
    %v139 = vld [vmem:[#allocation5 + $0x20] sm:$0xff]
    %v140 = vld [vmem:[#allocation5 + $0x28] sm:$0xff]
    %v141 = vld [vmem:[#allocation5 + $0x30] sm:$0xff]
    %v142 = vld [vmem:[#allocation5 + $0x38] sm:$0xff]
    %v143 = vld [vmem:[#allocation5 + $0x40] sm:$0xff]
    %v144 = vld [vmem:[#allocation5 + $0x48] sm:$0xff]
    %v145 = vld [vmem:[#allocation5 + $0x50] sm:$0xff]
    %v146 = vld [vmem:[#allocation5 + $0x58] sm:$0xff]
    %v147 = vld [vmem:[#allocation5 + $0x60] sm:$0xff]
    %v148 = vld [vmem:[#allocation5 + $0x68] sm:$0xff]
    %v149 = vld [vmem:[#allocation5 + $0x70] sm:$0xff]
    %v150 = vld [vmem:[#allocation5 + $0x78] sm:$0xff]
    %v151 = vld [vmem:[#allocation5 + $0x80] sm:$0xff]
    %v152 = vld [vmem:[#allocation5 + $0x88] sm:$0xff]
    %v153 = vld [vmem:[#allocation5 + $0x90] sm:$0xff]
    %v154 = vld [vmem:[#allocation5 + $0x98] sm:$0xff]
    %v155 = vld [vmem:[#allocation5 + $0xa0] sm:$0xff]
    %v156 = vld [vmem:[#allocation5 + $0xa8] sm:$0xff]
    %v157 = vld [vmem:[#allocation5 + $0xb0] sm:$0xff]
    %v158 = vld [vmem:[#allocation5 + $0xb8] sm:$0xff]
    %v159 = vld [vmem:[#allocation5 + $0xc0] sm:$0xff]
    %v160 = vld [vmem:[#allocation5 + $0xc8] sm:$0xff]
    %v161 = vld [vmem:[#allocation5 + $0xd0] sm:$0xff]
    %v162 = vld [vmem:[#allocation5 + $0xd8] sm:$0xff]
    %v163 = vld [vmem:[#allocation5 + $0xe0] sm:$0xff]
    %v164 = vld [vmem:[#allocation5 + $0xe8] sm:$0xff]
    %v165 = vld [vmem:[#allocation5 + $0xf0] sm:$0xff]
    %v166 = vld [vmem:[#allocation5 + $0xf8] sm:$0xff]
    %v167 = vld [vmem:[#allocation5 + $0x100] sm:$0xff]
    %v168 = vld [vmem:[#allocation5 + $0x108] sm:$0xff]
    %v169 = vld [vmem:[#allocation5 + $0x110] sm:$0xff]
    %v170 = vld [vmem:[#allocation5 + $0x118] sm:$0xff]
    %v171 = vld [vmem:[#allocation5 + $0x120] sm:$0xff]
    %v172 = vld [vmem:[#allocation5 + $0x128] sm:$0xff]
    %v173 = vld [vmem:[#allocation5 + $0x130] sm:$0xff]
    %v174 = vld [vmem:[#allocation5 + $0x138] sm:$0xff]
    %v175 = vld [vmem:[#allocation5 + $0x140] sm:$0xff]
    %v176 = vld [vmem:[#allocation5 + $0x148] sm:$0xff]
    %v177 = vld [vmem:[#allocation5 + $0x150] sm:$0xff]
    %v178 = vld [vmem:[#allocation5 + $0x158] sm:$0xff]
    %v179 = vld [vmem:[#allocation5 + $0x160] sm:$0xff]
    %v180 = vld [vmem:[#allocation5 + $0x168] sm:$0xff]
    %v181 = vld [vmem:[#allocation5 + $0x170] sm:$0xff]
    %v182 = vld [vmem:[#allocation5 + $0x178] sm:$0xff]
    %v183 = vld [vmem:[#allocation5 + $0x180] sm:$0xff]
    %v184 = vld [vmem:[#allocation5 + $0x188] sm:$0xff]
    %v185 = vld [vmem:[#allocation5 + $0x190] sm:$0xff]
    %v186 = vld [vmem:[#allocation5 + $0x198] sm:$0xff]
    %v187 = vld [vmem:[#allocation5 + $0x1a0] sm:$0xff]
    %v188 = vld [vmem:[#allocation5 + $0x1a8] sm:$0xff]
    %v189 = vld [vmem:[#allocation5 + $0x1b0] sm:$0xff]
    %v190 = vld [vmem:[#allocation5 + $0x1b8] sm:$0xff]
    %v191 = vld [vmem:[#allocation5 + $0x1c0] sm:$0xff]
    %v192 = vld [vmem:[#allocation5 + $0x1c8] sm:$0xff]
    %v193 = vld [vmem:[#allocation5 + $0x1d0] sm:$0xff]
    %v194 = vld [vmem:[#allocation5 + $0x1d8] sm:$0xff]
    %v195 = vld [vmem:[#allocation5 + $0x1e0] sm:$0xff]
    %v196 = vld [vmem:[#allocation5 + $0x1e8] sm:$0xff]
    %v197 = vld [vmem:[#allocation5 + $0x1f0] sm:$0xff]
    %v198 = vld [vmem:[#allocation5 + $0x1f8] sm:$0xff]
    %v199 = vld [vmem:[#allocation5 + $0x200] sm:$0xff]
    %v200 = vld [vmem:[#allocation5 + $0x208] sm:$0xff]
    %v201 = vld [vmem:[#allocation5 + $0x210] sm:$0xff]
    %v202 = vld [vmem:[#allocation5 + $0x218] sm:$0xff]
    %v203 = vld [vmem:[#allocation5 + $0x220] sm:$0xff]
    %v204 = vld [vmem:[#allocation5 + $0x228] sm:$0xff]
    %v205 = vld [vmem:[#allocation5 + $0x230] sm:$0xff]
    %v206 = vld [vmem:[#allocation5 + $0x238] sm:$0xff]
    %v207 = vld [vmem:[#allocation5 + $0x240] sm:$0xff]
    %v208 = vld [vmem:[#allocation5 + $0x248] sm:$0xff]
    %v209 = vld [vmem:[#allocation5 + $0x250] sm:$0xff]
    %v210 = vld [vmem:[#allocation5 + $0x258] sm:$0xff]
    %v211 = vld [vmem:[#allocation5 + $0x260] sm:$0xff]
    %v212 = vld [vmem:[#allocation5 + $0x268] sm:$0xff]
    %v213 = vld [vmem:[#allocation5 + $0x270] sm:$0xff]
    %v214 = vld [vmem:[#allocation5 + $0x278] sm:$0xff]
    %v215 = vld [vmem:[#allocation5 + $0x280] sm:$0xff]
    %v216 = vld [vmem:[#allocation5 + $0x288] sm:$0xff]
    %v217 = vld [vmem:[#allocation5 + $0x290] sm:$0xff]
    %v218 = vld [vmem:[#allocation5 + $0x298] sm:$0xff]
    %v219 = vld [vmem:[#allocation5 + $0x2a0] sm:$0xff]
    %v220 = vld [vmem:[#allocation5 + $0x2a8] sm:$0xff]
    %v221 = vld [vmem:[#allocation5 + $0x2b0] sm:$0xff]
    %v222 = vld [vmem:[#allocation5 + $0x2b8] sm:$0xff]
    %v223 = vld [vmem:[#allocation5 + $0x2c0] sm:$0xff]
    %v224 = vld [vmem:[#allocation5 + $0x2c8] sm:$0xff]
    %v225 = vld [vmem:[#allocation5 + $0x2d0] sm:$0xff]
    %v226 = vld [vmem:[#allocation5 + $0x2d8] sm:$0xff]
    %v227 = vld [vmem:[#allocation5 + $0x2e0] sm:$0xff]
    %v228 = vld [vmem:[#allocation5 + $0x2e8] sm:$0xff]
    %v229 = vld [vmem:[#allocation5 + $0x2f0] sm:$0xff]
    %v230 = vld [vmem:[#allocation5 + $0x2f8] sm:$0xff]
    %v231 = vld [vmem:[#allocation7] sm:$0x3]
    %v233 = vperm.slane %v231, 0
    %v234 = vperm.slane %v231, 1
    %v333 = vunpack.c.l.b16 %v135
    %v334 = vunpack.c.h.b16 %v135
    %v335 = vunpack.c.l.b16 %v136
    %v336 = vunpack.c.h.b16 %v136
    %v337 = vunpack.c.l.b16 %v137
    %v338 = vunpack.c.h.b16 %v137
    %v339 = vunpack.c.l.b16 %v138
    %v340 = vunpack.c.h.b16 %v138
    %v341 = vunpack.c.l.b16 %v139
    %v342 = vunpack.c.h.b16 %v139
    %v343 = vunpack.c.l.b16 %v140
    %v344 = vunpack.c.h.b16 %v140
    %v345 = vunpack.c.l.b16 %v141
    %v346 = vunpack.c.h.b16 %v141
    %v347 = vunpack.c.l.b16 %v142
    %v348 = vunpack.c.h.b16 %v142
    %v349 = vunpack.c.l.b16 %v143
    %v350 = vunpack.c.h.b16 %v143
    %v351 = vunpack.c.l.b16 %v144
    %v352 = vunpack.c.h.b16 %v144
    %v353 = vunpack.c.l.b16 %v145
    %v354 = vunpack.c.h.b16 %v145
    %v355 = vunpack.c.l.b16 %v146
    %v356 = vunpack.c.h.b16 %v146
    %v357 = vunpack.c.l.b16 %v147
    %v358 = vunpack.c.h.b16 %v147
    %v359 = vunpack.c.l.b16 %v148
    %v360 = vunpack.c.h.b16 %v148
    %v361 = vunpack.c.l.b16 %v149
    %v362 = vunpack.c.h.b16 %v149
    %v363 = vunpack.c.l.b16 %v150
    %v364 = vunpack.c.h.b16 %v150
    %v365 = vunpack.c.l.b16 %v151
    %v366 = vunpack.c.h.b16 %v151
    %v367 = vunpack.c.l.b16 %v152
    %v368 = vunpack.c.h.b16 %v152
    %v369 = vunpack.c.l.b16 %v153
    %v370 = vunpack.c.h.b16 %v153
    %v371 = vunpack.c.l.b16 %v154
    %v372 = vunpack.c.h.b16 %v154
    %v373 = vunpack.c.l.b16 %v155
    %v374 = vunpack.c.h.b16 %v155
    %v375 = vunpack.c.l.b16 %v156
    %v376 = vunpack.c.h.b16 %v156
    %v377 = vunpack.c.l.b16 %v157
    %v378 = vunpack.c.h.b16 %v157
    %v379 = vunpack.c.l.b16 %v158
    %v380 = vunpack.c.h.b16 %v158
    %v381 = vunpack.c.l.b16 %v159
    %v382 = vunpack.c.h.b16 %v159
    %v383 = vunpack.c.l.b16 %v160
    %v384 = vunpack.c.h.b16 %v160
    %v385 = vunpack.c.l.b16 %v161
    %v386 = vunpack.c.h.b16 %v161
    %v387 = vunpack.c.l.b16 %v162
    %v388 = vunpack.c.h.b16 %v162
    %v389 = vunpack.c.l.b16 %v163
    %v390 = vunpack.c.h.b16 %v163
    %v391 = vunpack.c.l.b16 %v164
    %v392 = vunpack.c.h.b16 %v164
    %v393 = vunpack.c.l.b16 %v165
    %v394 = vunpack.c.h.b16 %v165
    %v395 = vunpack.c.l.b16 %v166
    %v396 = vunpack.c.h.b16 %v166
    %v397 = vunpack.c.l.b16 %v167
    %v398 = vunpack.c.h.b16 %v167
    %v399 = vunpack.c.l.b16 %v168
    %v400 = vunpack.c.h.b16 %v168
    %v401 = vunpack.c.l.b16 %v169
    %v402 = vunpack.c.h.b16 %v169
    %v403 = vunpack.c.l.b16 %v170
    %v404 = vunpack.c.h.b16 %v170
    %v405 = vunpack.c.l.b16 %v171
    %v406 = vunpack.c.h.b16 %v171
    %v407 = vunpack.c.l.b16 %v172
    %v408 = vunpack.c.h.b16 %v172
    %v409 = vunpack.c.l.b16 %v173
    %v410 = vunpack.c.h.b16 %v173
    %v411 = vunpack.c.l.b16 %v174
    %v412 = vunpack.c.h.b16 %v174
    %v413 = vunpack.c.l.b16 %v175
    %v414 = vunpack.c.h.b16 %v175
    %v415 = vunpack.c.l.b16 %v176
    %v416 = vunpack.c.h.b16 %v176
    %v417 = vunpack.c.l.b16 %v177
    %v418 = vunpack.c.h.b16 %v177
    %v419 = vunpack.c.l.b16 %v178
    %v420 = vunpack.c.h.b16 %v178
    %v421 = vunpack.c.l.b16 %v179
    %v422 = vunpack.c.h.b16 %v179
    %v423 = vunpack.c.l.b16 %v180
    %v424 = vunpack.c.h.b16 %v180
    %v425 = vunpack.c.l.b16 %v181
    %v426 = vunpack.c.h.b16 %v181
    %v427 = vunpack.c.l.b16 %v182
    %v428 = vunpack.c.h.b16 %v182
    %v429 = vunpack.c.l.b16 %v183
    %v430 = vunpack.c.h.b16 %v183
    %v431 = vunpack.c.l.b16 %v184
    %v432 = vunpack.c.h.b16 %v184
    %v433 = vunpack.c.l.b16 %v185
    %v434 = vunpack.c.h.b16 %v185
    %v435 = vunpack.c.l.b16 %v186
    %v436 = vunpack.c.h.b16 %v186
    %v437 = vunpack.c.l.b16 %v187
    %v438 = vunpack.c.h.b16 %v187
    %v439 = vunpack.c.l.b16 %v188
    %v440 = vunpack.c.h.b16 %v188
    %v441 = vunpack.c.l.b16 %v189
    %v442 = vunpack.c.h.b16 %v189
    %v443 = vunpack.c.l.b16 %v190
    %v444 = vunpack.c.h.b16 %v190
    %v445 = vunpack.c.l.b16 %v191
    %v446 = vunpack.c.h.b16 %v191
    %v447 = vunpack.c.l.b16 %v192
    %v448 = vunpack.c.h.b16 %v192
    %v449 = vunpack.c.l.b16 %v193
    %v450 = vunpack.c.h.b16 %v193
    %v451 = vunpack.c.l.b16 %v194
    %v452 = vunpack.c.h.b16 %v194
    %v453 = vunpack.c.l.b16 %v195
    %v454 = vunpack.c.h.b16 %v195
    %v455 = vunpack.c.l.b16 %v196
    %v456 = vunpack.c.h.b16 %v196
    %v457 = vunpack.c.l.b16 %v197
    %v458 = vunpack.c.h.b16 %v197
    %v459 = vunpack.c.l.b16 %v198
    %v460 = vunpack.c.h.b16 %v198
    %v461 = vunpack.c.l.b16 %v199
    %v462 = vunpack.c.h.b16 %v199
    %v463 = vunpack.c.l.b16 %v200
    %v464 = vunpack.c.h.b16 %v200
    %v465 = vunpack.c.l.b16 %v201
    %v466 = vunpack.c.h.b16 %v201
    %v467 = vunpack.c.l.b16 %v202
    %v468 = vunpack.c.h.b16 %v202
    %v469 = vunpack.c.l.b16 %v203
    %v470 = vunpack.c.h.b16 %v203
    %v471 = vunpack.c.l.b16 %v204
    %v472 = vunpack.c.h.b16 %v204
    %v473 = vunpack.c.l.b16 %v205
    %v474 = vunpack.c.h.b16 %v205
    %v475 = vunpack.c.l.b16 %v206
    %v476 = vunpack.c.h.b16 %v206
    %v477 = vunpack.c.l.b16 %v207
    %v478 = vunpack.c.h.b16 %v207
    %v479 = vunpack.c.l.b16 %v208
    %v480 = vunpack.c.h.b16 %v208
    %v481 = vunpack.c.l.b16 %v209
    %v482 = vunpack.c.h.b16 %v209
    %v483 = vunpack.c.l.b16 %v210
    %v484 = vunpack.c.h.b16 %v210
    %v485 = vunpack.c.l.b16 %v211
    %v486 = vunpack.c.h.b16 %v211
    %v487 = vunpack.c.l.b16 %v212
    %v488 = vunpack.c.h.b16 %v212
    %v489 = vunpack.c.l.b16 %v213
    %v490 = vunpack.c.h.b16 %v213
    %v491 = vunpack.c.l.b16 %v214
    %v492 = vunpack.c.h.b16 %v214
    %v493 = vunpack.c.l.b16 %v215
    %v494 = vunpack.c.h.b16 %v215
    %v495 = vunpack.c.l.b16 %v216
    %v496 = vunpack.c.h.b16 %v216
    %v497 = vunpack.c.l.b16 %v217
    %v498 = vunpack.c.h.b16 %v217
    %v499 = vunpack.c.l.b16 %v218
    %v500 = vunpack.c.h.b16 %v218
    %v501 = vunpack.c.l.b16 %v219
    %v502 = vunpack.c.h.b16 %v219
    %v503 = vunpack.c.l.b16 %v220
    %v504 = vunpack.c.h.b16 %v220
    %v505 = vunpack.c.l.b16 %v221
    %v506 = vunpack.c.h.b16 %v221
    %v507 = vunpack.c.l.b16 %v222
    %v508 = vunpack.c.h.b16 %v222
    %v509 = vunpack.c.l.b16 %v223
    %v510 = vunpack.c.h.b16 %v223
    %v511 = vunpack.c.l.b16 %v224
    %v512 = vunpack.c.h.b16 %v224
    %v513 = vunpack.c.l.b16 %v225
    %v514 = vunpack.c.h.b16 %v225
    %v515 = vunpack.c.l.b16 %v226
    %v516 = vunpack.c.h.b16 %v226
    %v517 = vunpack.c.l.b16 %v227
    %v518 = vunpack.c.h.b16 %v227
    %v519 = vunpack.c.l.b16 %v228
    %v520 = vunpack.c.h.b16 %v228
    %v521 = vunpack.c.l.b16 %v229
    %v522 = vunpack.c.h.b16 %v229
    %v523 = vunpack.c.l.b16 %v230
    %v524 = vunpack.c.h.b16 %v230
    %v525 = vpack.c.b16 %v335, %v333
    %v526 = vpack.c.b16 %v336, %v334
    %v527 = vpack.c.b16 %v339, %v337
    %v528 = vpack.c.b16 %v340, %v338
    %v529 = vpack.c.b16 %v343, %v341
    %v530 = vpack.c.b16 %v344, %v342
    %v531 = vpack.c.b16 %v347, %v345
    %v532 = vpack.c.b16 %v348, %v346
    %v533 = vpack.c.b16 %v351, %v349
    %v534 = vpack.c.b16 %v352, %v350
    %v535 = vpack.c.b16 %v355, %v353
    %v536 = vpack.c.b16 %v356, %v354
    %v537 = vpack.c.b16 %v359, %v357
    %v538 = vpack.c.b16 %v360, %v358
    %v539 = vpack.c.b16 %v363, %v361
    %v540 = vpack.c.b16 %v364, %v362
    %v541 = vpack.c.b16 %v367, %v365
    %v542 = vpack.c.b16 %v368, %v366
    %v543 = vpack.c.b16 %v371, %v369
    %v544 = vpack.c.b16 %v372, %v370
    %v545 = vpack.c.b16 %v375, %v373
    %v546 = vpack.c.b16 %v376, %v374
    %v547 = vpack.c.b16 %v379, %v377
    %v548 = vpack.c.b16 %v380, %v378
    %v549 = vpack.c.b16 %v383, %v381
    %v550 = vpack.c.b16 %v384, %v382
    %v551 = vpack.c.b16 %v387, %v385
    %v552 = vpack.c.b16 %v388, %v386
    %v553 = vpack.c.b16 %v391, %v389
    %v554 = vpack.c.b16 %v392, %v390
    %v555 = vpack.c.b16 %v395, %v393
    %v556 = vpack.c.b16 %v396, %v394
    %v557 = vpack.c.b16 %v399, %v397
    %v558 = vpack.c.b16 %v400, %v398
    %v559 = vpack.c.b16 %v403, %v401
    %v560 = vpack.c.b16 %v404, %v402
    %v561 = vpack.c.b16 %v407, %v405
    %v562 = vpack.c.b16 %v408, %v406
    %v563 = vpack.c.b16 %v411, %v409
    %v564 = vpack.c.b16 %v412, %v410
    %v565 = vpack.c.b16 %v415, %v413
    %v566 = vpack.c.b16 %v416, %v414
    %v567 = vpack.c.b16 %v419, %v417
    %v568 = vpack.c.b16 %v420, %v418
    %v569 = vpack.c.b16 %v423, %v421
    %v570 = vpack.c.b16 %v424, %v422
    %v571 = vpack.c.b16 %v427, %v425
    %v572 = vpack.c.b16 %v428, %v426
    %v573 = vpack.c.b16 %v431, %v429
    %v574 = vpack.c.b16 %v432, %v430
    %v575 = vpack.c.b16 %v435, %v433
    %v576 = vpack.c.b16 %v436, %v434
    %v577 = vpack.c.b16 %v439, %v437
    %v578 = vpack.c.b16 %v440, %v438
    %v579 = vpack.c.b16 %v443, %v441
    %v580 = vpack.c.b16 %v444, %v442
    %v581 = vpack.c.b16 %v447, %v445
    %v582 = vpack.c.b16 %v448, %v446
    %v583 = vpack.c.b16 %v451, %v449
    %v584 = vpack.c.b16 %v452, %v450
    %v585 = vpack.c.b16 %v455, %v453
    %v586 = vpack.c.b16 %v456, %v454
    %v587 = vpack.c.b16 %v459, %v457
    %v588 = vpack.c.b16 %v460, %v458
    %v589 = vpack.c.b16 %v463, %v461
    %v590 = vpack.c.b16 %v464, %v462
    %v591 = vpack.c.b16 %v467, %v465
    %v592 = vpack.c.b16 %v468, %v466
    %v593 = vpack.c.b16 %v471, %v469
    %v594 = vpack.c.b16 %v472, %v470
    %v595 = vpack.c.b16 %v475, %v473
    %v596 = vpack.c.b16 %v476, %v474
    %v597 = vpack.c.b16 %v479, %v477
    %v598 = vpack.c.b16 %v480, %v478
    %v599 = vpack.c.b16 %v483, %v481
    %v600 = vpack.c.b16 %v484, %v482
    %v601 = vpack.c.b16 %v487, %v485
    %v602 = vpack.c.b16 %v488, %v486
    %v603 = vpack.c.b16 %v491, %v489
    %v604 = vpack.c.b16 %v492, %v490
    %v605 = vpack.c.b16 %v495, %v493
    %v606 = vpack.c.b16 %v496, %v494
    %v607 = vpack.c.b16 %v499, %v497
    %v608 = vpack.c.b16 %v500, %v498
    %v609 = vpack.c.b16 %v503, %v501
    %v610 = vpack.c.b16 %v504, %v502
    %v611 = vpack.c.b16 %v507, %v505
    %v612 = vpack.c.b16 %v508, %v506
    %v613 = vpack.c.b16 %v511, %v509
    %v614 = vpack.c.b16 %v512, %v510
    %v615 = vpack.c.b16 %v515, %v513
    %v616 = vpack.c.b16 %v516, %v514
    %v617 = vpack.c.b16 %v519, %v517
    %v618 = vpack.c.b16 %v520, %v518
    %v619 = vpack.c.b16 %v523, %v521
    %v620 = vpack.c.b16 %v524, %v522
    %717 = vmatpush.bf16.msra.mxu0 %v539
    %718 = vmatpush.bf16.msra.mxu0 %v537
    %719 = vmatpush.bf16.msra.mxu0 %v535
    %720 = vmatpush.bf16.msra.mxu0 %v533
    %721 = vmatpush.bf16.msra.mxu0 %v531
    %722 = vmatpush.bf16.msra.mxu0 %v529
    %723 = vmatpush.bf16.msra.mxu0 %v527
    %724 = vmatpush.bf16.msra.mxu0 %v525
    %725 = vmatmul.bf16.gmra.mxu0 %v129
    %v726 = vpop.f32.mrf.mxu0
    %v727 = vadd.f32 %v233, %v726
    %v728 = vpop.f32.mrf.mxu0
    %729 = vdwg.mxu0
    %730 = vmatpush.bf16.msra.mxu0 %v555
    %731 = vmatpush.bf16.msra.mxu0 %v553
    %732 = vmatpush.bf16.msra.mxu0 %v551
    %733 = vmatpush.bf16.msra.mxu0 %v549
    %734 = vmatpush.bf16.msra.mxu0 %v547
    %735 = vmatpush.bf16.msra.mxu0 %v545
    %736 = vmatpush.bf16.msra.mxu0 %v543
    %737 = vmatpush.bf16.msra.mxu0 %v541
    %738 = vmatmul.bf16.gmra.mxu0 %v130
    %v739 = vpop.f32.mrf.mxu0
    %v740 = vadd.f32 %v727, %v739
    %v741 = vpop.f32.mrf.mxu0
    %742 = vdwg.mxu0
    %743 = vmatpush.bf16.msra.mxu0 %v571
    %744 = vmatpush.bf16.msra.mxu0 %v569
    %745 = vmatpush.bf16.msra.mxu0 %v567
    %746 = vmatpush.bf16.msra.mxu0 %v565
    %747 = vmatpush.bf16.msra.mxu0 %v563
    %748 = vmatpush.bf16.msra.mxu0 %v561
    %749 = vmatpush.bf16.msra.mxu0 %v559
    %750 = vmatpush.bf16.msra.mxu0 %v557
    %751 = vmatmul.bf16.gmra.mxu0 %v131
    %v752 = vpop.f32.mrf.mxu0
    %v753 = vadd.f32 %v740, %v752
    %v754 = vpop.f32.mrf.mxu0
    %755 = vdwg.mxu0
    %756 = vmatpush.bf16.msra.mxu0 %v587
    %757 = vmatpush.bf16.msra.mxu0 %v585
    %758 = vmatpush.bf16.msra.mxu0 %v583
    %759 = vmatpush.bf16.msra.mxu0 %v581
    %760 = vmatpush.bf16.msra.mxu0 %v579
    %761 = vmatpush.bf16.msra.mxu0 %v577
    %762 = vmatpush.bf16.msra.mxu0 %v575
    %763 = vmatpush.bf16.msra.mxu0 %v573
    %764 = vmatmul.bf16.gmra.mxu0 %v132
    %v765 = vpop.f32.mrf.mxu0
    %v766 = vadd.f32 %v753, %v765
    %v767 = vpop.f32.mrf.mxu0
    %768 = vdwg.mxu0
    %769 = vmatpush.bf16.msra.mxu0 %v603
    %770 = vmatpush.bf16.msra.mxu0 %v601
    %771 = vmatpush.bf16.msra.mxu0 %v599
    %772 = vmatpush.bf16.msra.mxu0 %v597
    %773 = vmatpush.bf16.msra.mxu0 %v595
    %774 = vmatpush.bf16.msra.mxu0 %v593
    %775 = vmatpush.bf16.msra.mxu0 %v591
    %776 = vmatpush.bf16.msra.mxu0 %v589
    %777 = vmatmul.bf16.gmra.mxu0 %v133
    %v778 = vpop.f32.mrf.mxu0
    %v779 = vadd.f32 %v766, %v778
    %v780 = vpop.f32.mrf.mxu0
    %781 = vdwg.mxu0
    %782 = vmatpush.bf16.msra.mxu0 %v619
    %783 = vmatpush.bf16.msra.mxu0 %v617
    %784 = vmatpush.bf16.msra.mxu0 %v615
    %785 = vmatpush.bf16.msra.mxu0 %v613
    %786 = vmatpush.bf16.msra.mxu0 %v611
    %787 = vmatpush.bf16.msra.mxu0 %v609
    %788 = vmatpush.bf16.msra.mxu0 %v607
    %789 = vmatpush.bf16.msra.mxu0 %v605
    %790 = vmatmul.bf16.gmra.mxu0 %v134
    %v791 = vpop.f32.mrf.mxu0
    %v792 = vadd.f32 %v779, %v791
    %v793 = vpop.f32.mrf.mxu0
    %794 = vdwg.mxu0
    %795 = vmatpush.bf16.msra.mxu0 %v540
    %796 = vmatpush.bf16.msra.mxu0 %v538
    %797 = vmatpush.bf16.msra.mxu0 %v536
    %798 = vmatpush.bf16.msra.mxu0 %v534
    %799 = vmatpush.bf16.msra.mxu0 %v532
    %800 = vmatpush.bf16.msra.mxu0 %v530
    %801 = vmatpush.bf16.msra.mxu0 %v528
    %802 = vmatpush.bf16.msra.mxu0 %v526
    %803 = vmatmul.bf16.gmra.mxu0 %v129
    %v804 = vpop.f32.mrf.mxu0
    %v805 = vadd.f32 %v234, %v804
    %v806 = vpop.f32.mrf.mxu0
    %807 = vdwg.mxu0
    %808 = vmatpush.bf16.msra.mxu0 %v556
    %809 = vmatpush.bf16.msra.mxu0 %v554
    %810 = vmatpush.bf16.msra.mxu0 %v552
    %811 = vmatpush.bf16.msra.mxu0 %v550
    %812 = vmatpush.bf16.msra.mxu0 %v548
    %813 = vmatpush.bf16.msra.mxu0 %v546
    %814 = vmatpush.bf16.msra.mxu0 %v544
    %815 = vmatpush.bf16.msra.mxu0 %v542
    %816 = vmatmul.bf16.gmra.mxu0 %v130
    %v817 = vpop.f32.mrf.mxu0
    %v818 = vadd.f32 %v805, %v817
    %v819 = vpop.f32.mrf.mxu0
    %820 = vdwg.mxu0
    %821 = vmatpush.bf16.msra.mxu0 %v572
    %822 = vmatpush.bf16.msra.mxu0 %v570
    %823 = vmatpush.bf16.msra.mxu0 %v568
    %824 = vmatpush.bf16.msra.mxu0 %v566
    %825 = vmatpush.bf16.msra.mxu0 %v564
    %826 = vmatpush.bf16.msra.mxu0 %v562
    %827 = vmatpush.bf16.msra.mxu0 %v560
    %828 = vmatpush.bf16.msra.mxu0 %v558
    %829 = vmatmul.bf16.gmra.mxu0 %v131
    %v830 = vpop.f32.mrf.mxu0
    %v831 = vadd.f32 %v818, %v830
    %v832 = vpop.f32.mrf.mxu0
    %833 = vdwg.mxu0
    %834 = vmatpush.bf16.msra.mxu0 %v588
    %835 = vmatpush.bf16.msra.mxu0 %v586
    %836 = vmatpush.bf16.msra.mxu0 %v584
    %837 = vmatpush.bf16.msra.mxu0 %v582
    %838 = vmatpush.bf16.msra.mxu0 %v580
    %839 = vmatpush.bf16.msra.mxu0 %v578
    %840 = vmatpush.bf16.msra.mxu0 %v576
    %841 = vmatpush.bf16.msra.mxu0 %v574
    %842 = vmatmul.bf16.gmra.mxu0 %v132
    %v843 = vpop.f32.mrf.mxu0
    %v844 = vadd.f32 %v831, %v843
    %v845 = vpop.f32.mrf.mxu0
    %846 = vdwg.mxu0
    %847 = vmatpush.bf16.msra.mxu0 %v604
    %848 = vmatpush.bf16.msra.mxu0 %v602
    %849 = vmatpush.bf16.msra.mxu0 %v600
    %850 = vmatpush.bf16.msra.mxu0 %v598
    %851 = vmatpush.bf16.msra.mxu0 %v596
    %852 = vmatpush.bf16.msra.mxu0 %v594
    %853 = vmatpush.bf16.msra.mxu0 %v592
    %854 = vmatpush.bf16.msra.mxu0 %v590
    %855 = vmatmul.bf16.gmra.mxu0 %v133
    %v856 = vpop.f32.mrf.mxu0
    %v857 = vadd.f32 %v844, %v856
    %v858 = vpop.f32.mrf.mxu0
    %859 = vdwg.mxu0
    %860 = vmatpush.bf16.msra.mxu0 %v620
    %861 = vmatpush.bf16.msra.mxu0 %v618
    %862 = vmatpush.bf16.msra.mxu0 %v616
    %863 = vmatpush.bf16.msra.mxu0 %v614
    %864 = vmatpush.bf16.msra.mxu0 %v612
    %865 = vmatpush.bf16.msra.mxu0 %v610
    %866 = vmatpush.bf16.msra.mxu0 %v608
    %867 = vmatpush.bf16.msra.mxu0 %v606
    %868 = vmatmul.bf16.gmra.mxu0 %v134
    %v869 = vpop.f32.mrf.mxu0
    %v870 = vadd.f32 %v857, %v869
    %v871 = vpop.f32.mrf.mxu0
    %872 = vdwg.mxu0
    %vm873 = vcmp.ge.f32.partialorder %v792, 0.0
    %vm874 = vcmp.ge.f32.partialorder %v870, 0.0
    %v875 = vmul.f32 %v792, 0.2
    %v876 = vmul.f32 %v870, 0.2
    %v877 = vsel %vm873, %v792, %v875
    %v878 = vsel %vm874, %v870, %v876
    %v879 = vpack.c.bf16 %v877, %v877
    %v880 = vpack.c.bf16 %v878, %v878
    %v881 = vld [vmem:[#allocation8] sm:$0xf]
    %v882 = vld [vmem:[#allocation8 + $0x4] sm:$0xf]
    %v883 = vld [vmem:[#allocation8 + $0x8] sm:$0xf]
    %v884 = vld [vmem:[#allocation8 + $0xc] sm:$0xf]
    %v885 = vld [vmem:[#allocation8 + $0x10] sm:$0xf]
    %v886 = vld [vmem:[#allocation8 + $0x14] sm:$0xf]
    %v887 = vld [vmem:[#allocation8 + $0x18] sm:$0xf]
    %v888 = vld [vmem:[#allocation8 + $0x1c] sm:$0xf]
    %v889 = vld [vmem:[#allocation8 + $0x20] sm:$0xf]
    %v890 = vld [vmem:[#allocation8 + $0x24] sm:$0xf]
    %v891 = vld [vmem:[#allocation8 + $0x28] sm:$0xf]
    %v892 = vld [vmem:[#allocation8 + $0x2c] sm:$0xf]
    %v893 = vld [vmem:[#allocation8 + $0x30] sm:$0xf]
    %v894 = vld [vmem:[#allocation8 + $0x34] sm:$0xf]
    %v895 = vld [vmem:[#allocation8 + $0x38] sm:$0xf]
    %v896 = vld [vmem:[#allocation8 + $0x3c] sm:$0xf]
    %v897 = vld [vmem:[#allocation8 + $0x40] sm:$0xf]
    %v898 = vld [vmem:[#allocation8 + $0x44] sm:$0xf]
    %v899 = vld [vmem:[#allocation8 + $0x48] sm:$0xf]
    %v900 = vld [vmem:[#allocation8 + $0x4c] sm:$0xf]
    %v901 = vld [vmem:[#allocation8 + $0x50] sm:$0xf]
    %v902 = vld [vmem:[#allocation8 + $0x54] sm:$0xf]
    %v903 = vld [vmem:[#allocation8 + $0x58] sm:$0xf]
    %v904 = vld [vmem:[#allocation8 + $0x5c] sm:$0xf]
    %v905 = vld [vmem:[#allocation8 + $0x60] sm:$0xf]
    %v906 = vld [vmem:[#allocation8 + $0x64] sm:$0xf]
    %v907 = vld [vmem:[#allocation8 + $0x68] sm:$0xf]
    %v908 = vld [vmem:[#allocation8 + $0x6c] sm:$0xf]
    %v909 = vld [vmem:[#allocation8 + $0x70] sm:$0xf]
    %v910 = vld [vmem:[#allocation8 + $0x74] sm:$0xf]
    %v911 = vld [vmem:[#allocation8 + $0x78] sm:$0xf]
    %v912 = vld [vmem:[#allocation8 + $0x7c] sm:$0xf]
    %v913 = vld [vmem:[%s4] sm:$0x1]
    %v915 = vperm.slane %v913, 0
    %v949 = vunpack.c.l.b16 %v881
    %v950 = vunpack.c.l.b16 %v882
    %v951 = vunpack.c.l.b16 %v883
    %v952 = vunpack.c.l.b16 %v884
    %v953 = vunpack.c.l.b16 %v885
    %v954 = vunpack.c.l.b16 %v886
    %v955 = vunpack.c.l.b16 %v887
    %v956 = vunpack.c.l.b16 %v888
    %v957 = vunpack.c.l.b16 %v889
    %v958 = vunpack.c.l.b16 %v890
    %v959 = vunpack.c.l.b16 %v891
    %v960 = vunpack.c.l.b16 %v892
    %v961 = vunpack.c.l.b16 %v893
    %v962 = vunpack.c.l.b16 %v894
    %v963 = vunpack.c.l.b16 %v895
    %v964 = vunpack.c.l.b16 %v896
    %v965 = vunpack.c.l.b16 %v897
    %v966 = vunpack.c.l.b16 %v898
    %v967 = vunpack.c.l.b16 %v899
    %v968 = vunpack.c.l.b16 %v900
    %v969 = vunpack.c.l.b16 %v901
    %v970 = vunpack.c.l.b16 %v902
    %v971 = vunpack.c.l.b16 %v903
    %v972 = vunpack.c.l.b16 %v904
    %v973 = vunpack.c.l.b16 %v905
    %v974 = vunpack.c.l.b16 %v906
    %v975 = vunpack.c.l.b16 %v907
    %v976 = vunpack.c.l.b16 %v908
    %v977 = vunpack.c.l.b16 %v909
    %v978 = vunpack.c.l.b16 %v910
    %v979 = vunpack.c.l.b16 %v911
    %v980 = vunpack.c.l.b16 %v912
    %v981 = vpack.c.b16 %v950, %v949
    %v982 = vpack.c.b16 %v952, %v951
    %v983 = vpack.c.b16 %v954, %v953
    %v984 = vpack.c.b16 %v956, %v955
    %v985 = vpack.c.b16 %v958, %v957
    %v986 = vpack.c.b16 %v960, %v959
    %v987 = vpack.c.b16 %v962, %v961
    %v988 = vpack.c.b16 %v964, %v963
    %v989 = vpack.c.b16 %v966, %v965
    %v990 = vpack.c.b16 %v968, %v967
    %v991 = vpack.c.b16 %v970, %v969
    %v992 = vpack.c.b16 %v972, %v971
    %v993 = vpack.c.b16 %v974, %v973
    %v994 = vpack.c.b16 %v976, %v975
    %v995 = vpack.c.b16 %v978, %v977
    %v996 = vpack.c.b16 %v980, %v979
    %1013 = vmatpush.bf16.msra.mxu0 %v988
    %1014 = vmatpush.bf16.msra.mxu0 %v987
    %1015 = vmatpush.bf16.msra.mxu0 %v986
    %1016 = vmatpush.bf16.msra.mxu0 %v985
    %1017 = vmatpush.bf16.msra.mxu0 %v984
    %1018 = vmatpush.bf16.msra.mxu0 %v983
    %1019 = vmatpush.bf16.msra.mxu0 %v982
    %1020 = vmatpush.bf16.msra.mxu0 %v981
    %1021 = vmatmul.bf16.gmra.mxu0 %v879
    %v1022 = vpop.f32.mrf.mxu0
    %v1023 = vadd.f32 %v915, %v1022
    %v1024 = vpop.f32.mrf.mxu0
    %1025 = vdwg.mxu0
    %1026 = vmatpush.bf16.msra.mxu0 %v996
    %1027 = vmatpush.bf16.msra.mxu0 %v995
    %1028 = vmatpush.bf16.msra.mxu0 %v994
    %1029 = vmatpush.bf16.msra.mxu0 %v993
    %1030 = vmatpush.bf16.msra.mxu0 %v992
    %1031 = vmatpush.bf16.msra.mxu0 %v991
    %1032 = vmatpush.bf16.msra.mxu0 %v990
    %1033 = vmatpush.bf16.msra.mxu0 %v989
    %1034 = vmatmul.bf16.gmra.mxu0 %v880
    %v1035 = vpop.f32.mrf.mxu0
    %v1036 = vadd.f32 %v1023, %v1035
    %v1037 = vpop.f32.mrf.mxu0
    %1038 = vdwg.mxu0
    %vm1039 = vcmp.ge.f32.partialorder %v1036, 0.0
    %v1040 = vmul.f32 %v1036, 0.2
    %v1041 = vsel %vm1039, %v1036, %v1040
    %v1042 = vpack.c.bf16 %v1041, %v1041
    %v1043 = vld [vmem:[#allocation10] sm:$0xf]
    %v1044 = vld [vmem:[#allocation10 + $0x4] sm:$0xf]
    %v1045 = vld [vmem:[#allocation10 + $0x8] sm:$0xf]
    %v1046 = vld [vmem:[#allocation10 + $0xc] sm:$0xf]
    %v1047 = vld [vmem:[#allocation10 + $0x10] sm:$0xf]
    %v1048 = vld [vmem:[#allocation10 + $0x14] sm:$0xf]
    %v1049 = vld [vmem:[#allocation10 + $0x18] sm:$0xf]
    %v1050 = vld [vmem:[#allocation10 + $0x1c] sm:$0xf]
    %v1051 = vld [vmem:[#allocation10 + $0x20] sm:$0xf]
    %v1052 = vld [vmem:[#allocation10 + $0x24] sm:$0xf]
    %v1053 = vld [vmem:[#allocation10 + $0x28] sm:$0xf]
    %v1054 = vld [vmem:[#allocation10 + $0x2c] sm:$0xf]
    %v1055 = vld [vmem:[#allocation10 + $0x30] sm:$0xf]
    %v1056 = vld [vmem:[#allocation10 + $0x34] sm:$0xf]
    %v1057 = vld [vmem:[#allocation10 + $0x38] sm:$0xf]
    %v1058 = vld [vmem:[#allocation10 + $0x3c] sm:$0xf]
    %v1059 = vld [vmem:[%s6] sm:$0x1]
    %v1061 = vperm.slane %v1059, 0
    %v1079 = vunpack.c.l.b16 %v1043
    %v1080 = vunpack.c.l.b16 %v1044
    %v1081 = vunpack.c.l.b16 %v1045
    %v1082 = vunpack.c.l.b16 %v1046
    %v1083 = vunpack.c.l.b16 %v1047
    %v1084 = vunpack.c.l.b16 %v1048
    %v1085 = vunpack.c.l.b16 %v1049
    %v1086 = vunpack.c.l.b16 %v1050
    %v1087 = vunpack.c.l.b16 %v1051
    %v1088 = vunpack.c.l.b16 %v1052
    %v1089 = vunpack.c.l.b16 %v1053
    %v1090 = vunpack.c.l.b16 %v1054
    %v1091 = vunpack.c.l.b16 %v1055
    %v1092 = vunpack.c.l.b16 %v1056
    %v1093 = vunpack.c.l.b16 %v1057
    %v1094 = vunpack.c.l.b16 %v1058
    %v1095 = vpack.c.b16 %v1080, %v1079
    %v1096 = vpack.c.b16 %v1082, %v1081
    %v1097 = vpack.c.b16 %v1084, %v1083
    %v1098 = vpack.c.b16 %v1086, %v1085
    %v1099 = vpack.c.b16 %v1088, %v1087
    %v1100 = vpack.c.b16 %v1090, %v1089
    %v1101 = vpack.c.b16 %v1092, %v1091
    %v1102 = vpack.c.b16 %v1094, %v1093
    %1111 = vmatpush.bf16.msra.mxu0 %v1102
    %1112 = vmatpush.bf16.msra.mxu0 %v1101
    %1113 = vmatpush.bf16.msra.mxu0 %v1100
    %1114 = vmatpush.bf16.msra.mxu0 %v1099
    %1115 = vmatpush.bf16.msra.mxu0 %v1098
    %1116 = vmatpush.bf16.msra.mxu0 %v1097
    %1117 = vmatpush.bf16.msra.mxu0 %v1096
    %1118 = vmatpush.bf16.msra.mxu0 %v1095
    %1119 = vmatmul.bf16.gmra.mxu0 %v1042
    %v1120 = vpop.f32.mrf.mxu0
    %v1121 = vadd.f32 %v1061, %v1120
    %v1122 = vpop.f32.mrf.mxu0
    %1123 = vdwg.mxu0
    %vm1124 = vcmp.ge.f32.partialorder %v1121, 0.0
    %v1125 = vmul.f32 %v1121, 0.2
    %v1126 = vsel %vm1124, %v1121, %v1125
    %v1127 = vpack.c.bf16 %v1126, %v1126
    %v1128 = vld [vmem:[#allocation11] sm:$0xf]
    %v1129 = vld [vmem:[#allocation11 + $0x4] sm:$0xf]
    %v1130 = vld [vmem:[#allocation11 + $0x8] sm:$0xf]
    %v1131 = vld [vmem:[#allocation11 + $0xc] sm:$0xf]
    %v1132 = vld [vmem:[#allocation11 + $0x10] sm:$0xf]
    %v1133 = vld [vmem:[#allocation11 + $0x14] sm:$0xf]
    %v1134 = vld [vmem:[#allocation11 + $0x18] sm:$0xf]
    %v1135 = vld [vmem:[#allocation11 + $0x1c] sm:$0xf]
    %v1136 = vld [vmem:[#allocation11 + $0x20] sm:$0xf]
    %v1137 = vld [vmem:[#allocation11 + $0x24] sm:$0xf]
    %v1138 = vld [vmem:[#allocation11 + $0x28] sm:$0xf]
    %v1139 = vld [vmem:[#allocation11 + $0x2c] sm:$0xf]
    %v1140 = vld [vmem:[#allocation11 + $0x30] sm:$0xf]
    %v1141 = vld [vmem:[#allocation11 + $0x34] sm:$0xf]
    %v1142 = vld [vmem:[#allocation11 + $0x38] sm:$0xf]
    %v1143 = vld [vmem:[#allocation11 + $0x3c] sm:$0xf]
    %v1144 = vld [vmem:[%s8] sm:$0x1]
    %v1146 = vperm.slane %v1144, 0
    %v1164 = vunpack.c.l.b16 %v1128
    %v1165 = vunpack.c.l.b16 %v1129
    %v1166 = vunpack.c.l.b16 %v1130
    %v1167 = vunpack.c.l.b16 %v1131
    %v1168 = vunpack.c.l.b16 %v1132
    %v1169 = vunpack.c.l.b16 %v1133
    %v1170 = vunpack.c.l.b16 %v1134
    %v1171 = vunpack.c.l.b16 %v1135
    %v1172 = vunpack.c.l.b16 %v1136
    %v1173 = vunpack.c.l.b16 %v1137
    %v1174 = vunpack.c.l.b16 %v1138
    %v1175 = vunpack.c.l.b16 %v1139
    %v1176 = vunpack.c.l.b16 %v1140
    %v1177 = vunpack.c.l.b16 %v1141
    %v1178 = vunpack.c.l.b16 %v1142
    %v1179 = vunpack.c.l.b16 %v1143
    %v1180 = vpack.c.b16 %v1165, %v1164
    %v1181 = vpack.c.b16 %v1167, %v1166
    %v1182 = vpack.c.b16 %v1169, %v1168
    %v1183 = vpack.c.b16 %v1171, %v1170
    %v1184 = vpack.c.b16 %v1173, %v1172
    %v1185 = vpack.c.b16 %v1175, %v1174
    %v1186 = vpack.c.b16 %v1177, %v1176
    %v1187 = vpack.c.b16 %v1179, %v1178
    %1196 = vmatpush.bf16.msra.mxu0 %v1187
    %1197 = vmatpush.bf16.msra.mxu0 %v1186
    %1198 = vmatpush.bf16.msra.mxu0 %v1185
    %1199 = vmatpush.bf16.msra.mxu0 %v1184
    %1200 = vmatpush.bf16.msra.mxu0 %v1183
    %1201 = vmatpush.bf16.msra.mxu0 %v1182
    %1202 = vmatpush.bf16.msra.mxu0 %v1181
    %1203 = vmatpush.bf16.msra.mxu0 %v1180
    %1204 = vmatmul.bf16.gmra.mxu0 %v1127
    %v1205 = vpop.f32.mrf.mxu0
    %v1206 = vadd.f32 %v1146, %v1205
    %v1207 = vpop.f32.mrf.mxu0
    %1208 = vdwg.mxu0
    %v1209 = vpack.c.bf16 %v1206, %v1206
    %1210 = vst [vmem:[#allocation13] sm:$0xf] %v1209
    // Predicated region
    $region62: #{tpu_custom_call.1} parent=1 // pred_check
      _
    $region63: #{tpu_custom_call.1} parent=1 // pred_check_branch
      %1212 = sbr.rel (0) target = $region65
    $region64: #{tpu_custom_call.1} parent=1 // pred_region
      %1214 = vsyncadd [#allocation4], 0
      %s1216 = sshll.u32 [#allocation13], 4
      %s1217 = int_to_ptr.vmem [resolvable:$true] %s1216
      %s1218 = sshll.u32 %s9, 4
      %s1219 = int_to_ptr.hbm [resolvable:$true] %s1218
      %1221 = dma.vmem_to_hbm [thread:$0]  %s1217, 64, %s1219, [#allocation4]
    $region65: #{tpu_custom_call.1} parent=1 // pred_fallthru
      _
    // Predicated region
    $region66: #{tpu_custom_call.1} parent=1 // pred_check
      _
    $region67: #{tpu_custom_call.1} parent=1 // pred_check_branch
      %1223 = sbr.rel (0) target = $region69
    $region68: #{tpu_custom_call.1} parent=1 // pred_region
      %1225 = dma.done [#allocation4], 64
    $region69: #{tpu_custom_call.1} parent=1 // pred_fallthru
      _
    %1226 = vsyncpa [#allocation3], 1
    %1227 = vsyncpa [#allocation6], 1
    %1228 = vsyncpa [#allocation9], 1
    %1229 = vsyncpa [#allocation12], 1
    %1230 = vsyncpa [#allocation4], 1

</llo_original>
